<compile_context>
chip_gen: v7x
topology: tpu7x:2x2x1
jax: 0.10.0
libtpu: 0.0.40
codegen_flags: <defaults>
</compile_context>

<pallas_src>
import jax
import jax.numpy as jnp
from jax.experimental import pallas as pl
from jax.experimental.pallas import tpu as pltpu


# ----------------------------------------------------------------------------
# Pallas kernel
#   grid = (batch_blocks, feature_blocks)
#   per feature block jn:
#     pooled_jn = tanh(cls @ wp[:, jn] + bp[jn])          (bf16 MXU, f32 acc)
#     acc      += pooled_jn @ w1[jn, :]                    (bf16 MXU, f32 acc)
#   on last jn:
#     h      = acc + b1            (dropout(p=0.4) eval-mode -> identity)
#     logits = h @ w2 + b2         (f32, cheap H x C_pad)   (dropout -> identity)
# ----------------------------------------------------------------------------
def albert_head_kernel(cls_ref, wp_ref, bp_ref, w1_ref, b1_ref, w2_ref, b2_ref,
                       out_ref, acc_ref):
    j = pl.program_id(1)

    @pl.when(j == 0)
    def _():
        acc_ref[...] = jnp.zeros_like(acc_ref)

    cls = cls_ref[...]                                            # (tm, H) bf16

    # ALBERT pooler column block (== bert_model(token_ids)[1] slice): tanh in f32.
    pooled_j = jnp.tanh(
        jnp.dot(cls, wp_ref[...], preferred_element_type=jnp.float32)
        + bp_ref[...]
    )                                                             # (tm, tn) f32

    # fc1 partial reduction over the pooled feature dim.
    acc_ref[...] += jnp.dot(pooled_j.astype(cls.dtype), w1_ref[...],
                            preferred_element_type=jnp.float32)   # (tm, H) f32

    @pl.when(j == pl.num_programs(1) - 1)
    def _():
        h = acc_ref[...] + b1_ref[...]                            # (tm, H) f32
        # fc2 kept fully in f32 (tiny matmul) for bit-closeness to the torch head.
        logits = (jnp.dot(h, w2_ref[...], preferred_element_type=jnp.float32)
                  + b2_ref[...])                                  # (tm, C_pad)
        out_ref[...] = logits.astype(out_ref.dtype)               # lane-dense store


# ----------------------------------------------------------------------------
# One-time parameter preparation (hoisted out of the per-call wrapper)
# ----------------------------------------------------------------------------
def prepare_albert_head_params(wp, bp, w1, b1, w2, b2):
    """Cast the big weights to bf16 and lane-pad fc2 once, ahead of time."""
    H = wp.shape[0]
    C = w2.shape[1]
    C_pad = max(((C + 127) // 128) * 128, 128)
    return {
        "wp": wp.astype(jnp.bfloat16),                                   # (H, H)
        "bp": jnp.reshape(bp, (1, H)).astype(jnp.float32),               # (1, H)
        "w1": w1.astype(jnp.bfloat16),                                   # (H, H)
        "b1": jnp.reshape(b1, (1, H)).astype(jnp.float32),               # (1, H)
        "w2": jnp.zeros((H, C_pad), jnp.float32).at[:, :C].set(
            w2.astype(jnp.float32)),                                     # (H, C_pad) f32
        "b2": jnp.zeros((1, C_pad), jnp.float32).at[:, :C].set(
            jnp.reshape(b2, (1, C)).astype(jnp.float32)),                # (1, C_pad)
    }


def _round_up(x, m):
    return ((x + m - 1) // m) * m


def _choose_tm(B, block_m):
    """Balanced batch tiling; >=2 blocks when B >= 16 so both v7x TCs get work."""
    nb = max(1, -(-B // block_m))
    if B >= 16:
        nb = max(nb, 2)          # harmless extra grid step on single-TC v5e/v6e
    tm = _round_up(-(-B // nb), 8)
    return tm, nb


def _choose_tn(H, block_n=None):
    """Feature-dim tile for the (H, H) weights."""
    if block_n is not None:
        assert H % block_n == 0 and block_n % 128 == 0
        return block_n
    if H <= 1024 or H % 128 != 0:
        return H                 # small H: whole weight resident, single step
    for tn in (512, 256, 128):
        if H % tn == 0:
            return tn
    return H


def _vmem_limit_bytes():
    """Generation-aware VMEM limit with headroom for compiler-internal scratch."""
    try:
        cap = int(pltpu.get_tpu_info().vmem_capacity_bytes)
        return max(32 << 20, min(int(cap * 0.85), 110 << 20))
    except Exception:
        return 64 << 20


# ----------------------------------------------------------------------------
# Wrapper
# ----------------------------------------------------------------------------
def albert_classifier_head(cls_tok, head, num_class, *, block_m=256, block_n=None):
    """cls_tok: (B, H) first-token hidden state; returns (B, num_class) f32 logits."""
    B, H = cls_tok.shape
    C = num_class
    C_pad = head["w2"].shape[1]

    # Bound f32 intermediate (accumulator) pressure at large H.
    if H >= 2048:
        block_m = min(block_m, 256)

    tn = _choose_tn(H, block_n)
    tm, nb = _choose_tm(B, block_m)
    B_pad = tm * nb
    n_blocks = H // tn

    # Only the small per-call activation is padded here (padded rows produce
    # garbage logits that are sliced off below; never reduce over them).
    cls_p = jnp.zeros((B_pad, H), jnp.bfloat16).at[:B, :].set(
        cls_tok.astype(jnp.bfloat16))

    flops = 2 * B_pad * (2 * H * H + H * C_pad)
    bytes_accessed = (2 * H * H * 2            # wp, w1 (bf16)
                      + H * C_pad * 4          # w2 (f32)
                      + (2 * H + C_pad) * 4    # biases
                      + B_pad * H * 2          # cls in (bf16)
                      + B_pad * C_pad * 4)     # logits out (f32)

    out_pad = pl.pallas_call(
        albert_head_kernel,
        out_shape=jax.ShapeDtypeStruct((B_pad, C_pad), jnp.float32),
        grid=(nb, n_blocks),
        in_specs=[
            pl.BlockSpec((tm, H), lambda i, j: (i, 0)),        # cls rows (batch-tiled)
            pl.BlockSpec((H, tn), lambda i, j: (0, j)),        # pooler weight col-tile
            pl.BlockSpec((1, tn), lambda i, j: (0, j)),        # pooler bias tile
            pl.BlockSpec((tn, H), lambda i, j: (j, 0)),        # fc1 weight row-tile
            pl.BlockSpec((1, H), lambda i, j: (0, 0)),         # fc1 bias (resident)
            pl.BlockSpec((H, C_pad), lambda i, j: (0, 0)),     # fc2 weight (resident, f32)
            pl.BlockSpec((1, C_pad), lambda i, j: (0, 0)),     # fc2 bias (resident)
        ],
        out_specs=pl.BlockSpec((tm, C_pad), lambda i, j: (i, 0)),
        scratch_shapes=[pltpu.VMEM((tm, H), jnp.float32)],     # fc1 accumulator
        compiler_params=pltpu.CompilerParams(
            dimension_semantics=("parallel", "arbitrary"),
            vmem_limit_bytes=_vmem_limit_bytes(),
        ),
        cost_estimate=pl.CostEstimate(
            flops=int(flops),
            transcendentals=int(B_pad * H),
            bytes_accessed=int(bytes_accessed),
        ),
    )(cls_p, head["wp"], head["bp"], head["w1"], head["b1"], head["w2"], head["b2"])

    return out_pad[:B, :C]


# ----------------------------------------------------------------------------
# Plain-JAX glue: deterministic ALBERT-style encoder stand-in (bert_model)
# ----------------------------------------------------------------------------
def layer_norm(x, g, b, eps=1e-12):
    mu = jnp.mean(x, axis=-1, keepdims=True)
    var = jnp.mean((x - mu) ** 2, axis=-1, keepdims=True)
    return (x - mu) * jax.lax.rsqrt(var + eps) * g + b


def make_params(key, vocab, max_pos, hidden, inter, num_class):
    ks = jax.random.split(key, 16)
    s = 0.02
    return {
        "word_emb": jax.random.normal(ks[0], (vocab, hidden), jnp.float32) * s,
        "pos_emb":  jax.random.normal(ks[1], (max_pos, hidden), jnp.float32) * s,
        "emb_ln_g": jnp.ones((hidden,), jnp.float32),
        "emb_ln_b": jnp.zeros((hidden,), jnp.float32),
        # shared transformer layer (ALBERT: same weights reused per layer)
        "wq": jax.random.normal(ks[2], (hidden, hidden), jnp.float32) * s,
        "wk": jax.random.normal(ks[3], (hidden, hidden), jnp.float32) * s,
        "wv": jax.random.normal(ks[4], (hidden, hidden), jnp.float32) * s,
        "wo": jax.random.normal(ks[5], (hidden, hidden), jnp.float32) * s,
        "attn_ln_g": jnp.ones((hidden,), jnp.float32),
        "attn_ln_b": jnp.zeros((hidden,), jnp.float32),
        "wi": jax.random.normal(ks[6], (hidden, inter), jnp.float32) * s,
        "bi": jnp.zeros((inter,), jnp.float32),
        "wo2": jax.random.normal(ks[7], (inter, hidden), jnp.float32) * s,
        "bo2": jnp.zeros((hidden,), jnp.float32),
        "ffn_ln_g": jnp.ones((hidden,), jnp.float32),
        "ffn_ln_b": jnp.zeros((hidden,), jnp.float32),
        # pooler (produces bert_model(...)[1])
        "wp": jax.random.normal(ks[8], (hidden, hidden), jnp.float32) * s,
        "bp": jnp.zeros((1, hidden), jnp.float32),
        # classifier head (AlbertClassfier.fc1 / fc2)
        "w1": jax.random.normal(ks[9], (hidden, hidden), jnp.float32) * s,
        "b1": jnp.zeros((1, hidden), jnp.float32),
        "w2": jax.random.normal(ks[10], (hidden, num_class), jnp.float32) * s,
        "b2": jnp.zeros((1, num_class), jnp.float32),
    }


def albert_encoder(params, token_ids, num_layers=2, num_heads=4):
    B, L = token_ids.shape
    H = params["word_emb"].shape[1]
    hd = H // num_heads

    x = params["word_emb"][token_ids] + params["pos_emb"][:L][None, :, :]
    x = layer_norm(x, params["emb_ln_g"], params["emb_ln_b"])

    for _ in range(num_layers):  # ALBERT: shared layer weights
        q = (x @ params["wq"]).reshape(B, L, num_heads, hd).transpose(0, 2, 1, 3)
        k = (x @ params["wk"]).reshape(B, L, num_heads, hd).transpose(0, 2, 1, 3)
        v = (x @ params["wv"]).reshape(B, L, num_heads, hd).transpose(0, 2, 1, 3)
        scores = jnp.einsum("bhqd,bhkd->bhqk", q, k) / jnp.sqrt(float(hd))
        attn = jax.nn.softmax(scores, axis=-1)
        ctx = jnp.einsum("bhqk,bhkd->bhqd", attn, v)
        ctx = ctx.transpose(0, 2, 1, 3).reshape(B, L, H) @ params["wo"]
        x = layer_norm(x + ctx, params["attn_ln_g"], params["attn_ln_b"])

        ff = jax.nn.gelu(x @ params["wi"] + params["bi"]) @ params["wo2"] + params["bo2"]
        x = layer_norm(x + ff, params["ffn_ln_g"], params["ffn_ln_b"])

    return x  # last hidden state (B, L, H)


def albert_classifier_forward(params, head, token_ids, num_class):
    seq_out = albert_encoder(params, token_ids)        # bert_model(token_ids)[0]
    cls_tok = seq_out[:, 0, :]                         # first token -> pooler input
    # Pallas kernel: pooler + fc1 + fc2
    # (== bert_model(...)[1] -> dropout -> fc1 -> dropout -> fc2, eval-mode dropout)
    return albert_classifier_head(cls_tok, head, num_class)


# ----------------------------------------------------------------------------
# Reference (pure JAX, f32) for sanity checks of the fused head
# ----------------------------------------------------------------------------
def reference_head(cls_tok, wp, bp, w1, b1, w2, b2):
    pooled = jnp.tanh(cls_tok @ wp + jnp.reshape(bp, (1, -1)))
    h = pooled @ w1 + jnp.reshape(b1, (1, -1))
    return h @ w2 + jnp.reshape(b2, (1, -1))


if __name__ == "__main__":
    # ---- Test 1: full forward (encoder stand-in + fused head), small shapes ----
    B, L, H, INTER, VOCAB, NUM_CLASS = 4, 8, 128, 256, 100, 5

    key = jax.random.PRNGKey(0)
    pkey, tkey, hkey = jax.random.split(key, 3)
    params = make_params(pkey, VOCAB, L, H, INTER, NUM_CLASS)
    token_ids = jax.random.randint(tkey, (B, L), 0, VOCAB, dtype=jnp.int32)

    head = prepare_albert_head_params(params["wp"], params["bp"],
                                      params["w1"], params["b1"],
                                      params["w2"], params["b2"])

    logits = albert_classifier_forward(params, head, token_ids, NUM_CLASS)
    logits = jax.block_until_ready(logits)

    seq_out = albert_encoder(params, token_ids)
    ref = reference_head(seq_out[:, 0, :], params["wp"], params["bp"],
                         params["w1"], params["b1"], params["w2"], params["b2"])
    assert logits.shape == (B, NUM_CLASS)
    assert jnp.allclose(logits, ref, atol=2e-2, rtol=2e-2)

    # ---- Test 2: head-only, exercising batch-block + feature-tile accumulation ----
    B2, H2 = 20, 256
    ks = jax.random.split(hkey, 7)
    cls2 = jax.random.normal(ks[0], (B2, H2), jnp.float32)
    wp2 = jax.random.normal(ks[1], (H2, H2), jnp.float32) * 0.02
    bp2 = jax.random.normal(ks[2], (1, H2), jnp.float32) * 0.02
    w12 = jax.random.normal(ks[3], (H2, H2), jnp.float32) * 0.02
    b12 = jax.random.normal(ks[4], (1, H2), jnp.float32) * 0.02
    w22 = jax.random.normal(ks[5], (H2, NUM_CLASS), jnp.float32) * 0.02
    b22 = jax.random.normal(ks[6], (1, NUM_CLASS), jnp.float32) * 0.02

    head2 = prepare_albert_head_params(wp2, bp2, w12, b12, w22, b22)
    out2 = albert_classifier_head(cls2, head2, NUM_CLASS, block_m=256, block_n=128)
    out2 = jax.block_until_ready(out2)
    ref2 = reference_head(cls2, wp2, bp2, w12, b12, w22, b22)
    assert out2.shape == (B2, NUM_CLASS)
    assert jnp.allclose(out2, ref2, atol=2e-2, rtol=2e-2)

    print("KERNEL_OK")
</pallas_src>

<mosaic_0001>
module attributes {stable_mosaic.version = 11 : i64} {
  func.func @albert_head_kernel(%arg0: i32, %arg1: i32, %arg2: memref<8x128xbf16, #tpu.memory_space<vmem>>, %arg3: memref<128x128xbf16, #tpu.memory_space<vmem>>, %arg4: memref<1x128xf32, #tpu.memory_space<vmem>>, %arg5: memref<128x128xbf16, #tpu.memory_space<vmem>>, %arg6: memref<1x128xf32, #tpu.memory_space<vmem>>, %arg7: memref<128x128xf32, #tpu.memory_space<vmem>>, %arg8: memref<1x128xf32, #tpu.memory_space<vmem>>, %arg9: memref<8x128xf32, #tpu.memory_space<vmem>>, %arg10: memref<8x128xf32, #tpu.memory_space<vmem>>) attributes {dimension_semantics = [#tpu.dimension_semantics<parallel>, #tpu.dimension_semantics<arbitrary>], iteration_bounds = array<i64: 1, 1>, scalar_prefetch = 0 : i64, scratch_operands = 1 : i64, tpu.core_type = #tpu.core_type<tc>, window_params = [{transform_indices = @transform_0, window_bounds = array<i64: 8, 128>}, {transform_indices = @transform_1, window_bounds = array<i64: 128, 128>}, {transform_indices = @transform_2, window_bounds = array<i64: 1, 128>}, {transform_indices = @transform_3, window_bounds = array<i64: 128, 128>}, {pipeline_mode = #tpu.pipeline_mode<synchronous>, transform_indices = @transform_4, window_bounds = array<i64: 1, 128>}, {pipeline_mode = #tpu.pipeline_mode<synchronous>, transform_indices = @transform_5, window_bounds = array<i64: 128, 128>}, {pipeline_mode = #tpu.pipeline_mode<synchronous>, transform_indices = @transform_6, window_bounds = array<i64: 1, 128>}, {transform_indices = @transform_7, window_bounds = array<i64: 8, 128>}]} {
    %c0_i32 = arith.constant 0 : i32
    %0 = arith.cmpi eq, %arg1, %c0_i32 : i32
    %1 = arith.extui %0 : i1 to i32
    %c0_i32_0 = arith.constant 0 : i32
    %2 = arith.cmpi ne, %1, %c0_i32_0 : i32
    scf.if %2 {
      %cst_15 = arith.constant 0.000000e+00 : f32
      %19 = vector.broadcast %cst_15 : f32 to vector<8x128xf32>
      %c0_16 = arith.constant 0 : index
      %c0_17 = arith.constant 0 : index
      %20 = vector.load %arg10[%c0_16, %c0_17] : memref<8x128xf32, #tpu.memory_space<vmem>>, vector<8x128xf32>
      tpu.vector_store %arg10[%c0_16, %c0_17], %19 {strides = array<i32>} : memref<8x128xf32, #tpu.memory_space<vmem>>, vector<8x128xf32>,
    } else {
    }
    %c0 = arith.constant 0 : index
    %c0_1 = arith.constant 0 : index
    %3 = vector.load %arg2[%c0, %c0_1] : memref<8x128xbf16, #tpu.memory_space<vmem>>, vector<8x128xbf16>
    %c0_2 = arith.constant 0 : index
    %c0_3 = arith.constant 0 : index
    %4 = vector.load %arg3[%c0_2, %c0_3] : memref<128x128xbf16, #tpu.memory_space<vmem>>, vector<128x128xbf16>
    %cst = arith.constant dense<0.000000e+00> : vector<8x128xf32>
    %5 = tpu.matmul %3, %4, %cst {dimension_numbers = #tpu.dot_dimension_numbers<[1], [0], [0], [1], [0, 0, 1, 1], [], []>} : vector<8x128xbf16>, vector<128x128xbf16>, vector<8x128xf32> -> vector<8x128xf32>
    %c0_4 = arith.constant 0 : index
    %c0_5 = arith.constant 0 : index
    %6 = vector.load %arg4[%c0_4, %c0_5] : memref<1x128xf32, #tpu.memory_space<vmem>>, vector<1x128xf32>
    %7 = vector.broadcast %6 : vector<1x128xf32> to vector<8x128xf32>
    %8 = arith.addf %5, %7 : vector<8x128xf32>
    %9 = math.tanh %8 : vector<8x128xf32>
    %c0_6 = arith.constant 0 : index
    %c0_7 = arith.constant 0 : index
    %10 = vector.load %arg10[%c0_6, %c0_7] : memref<8x128xf32, #tpu.memory_space<vmem>>, vector<8x128xf32>
    %11 = arith.truncf %9 : vector<8x128xf32> to vector<8x128xbf16>
    %c0_8 = arith.constant 0 : index
    %c0_9 = arith.constant 0 : index
    %12 = vector.load %arg5[%c0_8, %c0_9] : memref<128x128xbf16, #tpu.memory_space<vmem>>, vector<128x128xbf16>
    %cst_10 = arith.constant dense<0.000000e+00> : vector<8x128xf32>
    %13 = tpu.matmul %11, %12, %cst_10 {dimension_numbers = #tpu.dot_dimension_numbers<[1], [0], [0], [1], [0, 0, 1, 1], [], []>} : vector<8x128xbf16>, vector<128x128xbf16>, vector<8x128xf32> -> vector<8x128xf32>
    %14 = arith.addf %10, %13 : vector<8x128xf32>
    %c0_11 = arith.constant 0 : index
    %c0_12 = arith.constant 0 : index
    %15 = vector.load %arg10[%c0_11, %c0_12] : memref<8x128xf32, #tpu.memory_space<vmem>>, vector<8x128xf32>
    tpu.vector_store %arg10[%c0_11, %c0_12], %14 {strides = array<i32>} : memref<8x128xf32, #tpu.memory_space<vmem>>, vector<8x128xf32>,
    %c0_i32_13 = arith.constant 0 : i32
    %16 = arith.cmpi eq, %arg1, %c0_i32_13 : i32
    %17 = arith.extui %16 : i1 to i32
    %c0_i32_14 = arith.constant 0 : i32
    %18 = arith.cmpi ne, %17, %c0_i32_14 : i32
    scf.if %18 {
      %c0_15 = arith.constant 0 : index
      %c0_16 = arith.constant 0 : index
      %19 = vector.load %arg10[%c0_15, %c0_16] : memref<8x128xf32, #tpu.memory_space<vmem>>, vector<8x128xf32>
      %c0_17 = arith.constant 0 : index
      %c0_18 = arith.constant 0 : index
      %20 = vector.load %arg6[%c0_17, %c0_18] : memref<1x128xf32, #tpu.memory_space<vmem>>, vector<1x128xf32>
      %21 = vector.broadcast %20 : vector<1x128xf32> to vector<8x128xf32>
      %22 = arith.addf %19, %21 : vector<8x128xf32>
      %c0_19 = arith.constant 0 : index
      %c0_20 = arith.constant 0 : index
      %23 = vector.load %arg7[%c0_19, %c0_20] : memref<128x128xf32, #tpu.memory_space<vmem>>, vector<128x128xf32>
      %cst_21 = arith.constant dense<0.000000e+00> : vector<8x128xf32>
      %24 = tpu.matmul %22, %23, %cst_21 {dimension_numbers = #tpu.dot_dimension_numbers<[1], [0], [0], [1], [0, 0, 1, 1], [], []>} : vector<8x128xf32>, vector<128x128xf32>, vector<8x128xf32> -> vector<8x128xf32>
      %c0_22 = arith.constant 0 : index
      %c0_23 = arith.constant 0 : index
      %25 = vector.load %arg8[%c0_22, %c0_23] : memref<1x128xf32, #tpu.memory_space<vmem>>, vector<1x128xf32>
      %26 = vector.broadcast %25 : vector<1x128xf32> to vector<8x128xf32>
      %27 = arith.addf %24, %26 : vector<8x128xf32>
      %c0_24 = arith.constant 0 : index
      %c0_25 = arith.constant 0 : index
      %28 = vector.load %arg9[%c0_24, %c0_25] : memref<8x128xf32, #tpu.memory_space<vmem>>, vector<8x128xf32>
      tpu.vector_store %arg9[%c0_24, %c0_25], %27 {strides = array<i32>} : memref<8x128xf32, #tpu.memory_space<vmem>>, vector<8x128xf32>,
    } else {
    }
    return
  }
  func.func @transform_0(%arg0: i32, %arg1: i32) -> (i32, i32) {
    %c0_i32 = arith.constant 0 : i32
    %c0_i32_0 = arith.constant 0 : i32
    return %arg0, %c0_i32 : i32, i32
  }
  func.func @transform_1(%arg0: i32, %arg1: i32) -> (i32, i32) {
    %c0_i32 = arith.constant 0 : i32
    %c0_i32_0 = arith.constant 0 : i32
    return %c0_i32, %arg1 : i32, i32
  }
  func.func @transform_2(%arg0: i32, %arg1: i32) -> (i32, i32) {
    %c0_i32 = arith.constant 0 : i32
    %c0_i32_0 = arith.constant 0 : i32
    return %c0_i32, %arg1 : i32, i32
  }
  func.func @transform_3(%arg0: i32, %arg1: i32) -> (i32, i32) {
    %c0_i32 = arith.constant 0 : i32
    %c0_i32_0 = arith.constant 0 : i32
    return %arg1, %c0_i32 : i32, i32
  }
  func.func @transform_4(%arg0: i32, %arg1: i32) -> (i32, i32) {
    %c0_i32 = arith.constant 0 : i32
    %c0_i32_0 = arith.constant 0 : i32
    %c0_i32_1 = arith.constant 0 : i32
    return %c0_i32, %c0_i32_0 : i32, i32
  }
  func.func @transform_5(%arg0: i32, %arg1: i32) -> (i32, i32) {
    %c0_i32 = arith.constant 0 : i32
    %c0_i32_0 = arith.constant 0 : i32
    %c0_i32_1 = arith.constant 0 : i32
    return %c0_i32, %c0_i32_0 : i32, i32
  }
  func.func @transform_6(%arg0: i32, %arg1: i32) -> (i32, i32) {
    %c0_i32 = arith.constant 0 : i32
    %c0_i32_0 = arith.constant 0 : i32
    %c0_i32_1 = arith.constant 0 : i32
    return %c0_i32, %c0_i32_0 : i32, i32
  }
  func.func @transform_7(%arg0: i32, %arg1: i32) -> (i32, i32) {
    %c0_i32 = arith.constant 0 : i32
    %c0_i32_0 = arith.constant 0 : i32
    return %arg0, %c0_i32 : i32, i32
  }
}

</mosaic_0001>

<llo_original>
// kernel: tpu_custom_call.1
$region0: #{tpu_custom_call.1}
  #allocation0 [shape = 'u32[]', space=smem, size = 0x4, offset = 0x4, fixed_abs, tag = 'smem constant byte address 0x4 - core index']
  #allocation1 [shape = 'u32[144,128]{1,0:T(1,128)}', space=vmem, size = 0x12000, scoped, tag = 'internal scratch']
  #allocation2 [shape = 'f32[8,128]{1,0:T(8,128)}', space=vmem, size = 0x1000, scoped, tag = 'scratch operand']
  %s0 = inlined_call_operand.hbm [shape: bf16[8,128], index: 0, kind: input, shape index: {}]
  %s1 = inlined_call_operand.hbm [shape: bf16[128,128], index: 1, kind: input, shape index: {}]
  %s2 = inlined_call_operand.hbm [shape: f32[1,128], index: 2, kind: input, shape index: {}]
  %s3 = inlined_call_operand.hbm [shape: bf16[128,128], index: 3, kind: input, shape index: {}]
  %s4 = inlined_call_operand.hbm [shape: f32[1,128], index: 4, kind: input, shape index: {}]
  %s5 = inlined_call_operand.hbm [shape: f32[128,128], index: 5, kind: input, shape index: {}]
  %s6 = inlined_call_operand.hbm [shape: f32[1,128], index: 6, kind: input, shape index: {}]
  %s7 = inlined_call_operand.hbm [shape: f32[8,128], index: 7, kind: output, shape index: {}]
  %s8 = sld [smem:[#allocation0]]
  $region74: #{tpu_custom_call.1} parent=0
    _
  %s10 = ssub.s32 1, %s8
  %s11 = scalar_select 0, %s10, %s8
  $region1: #{tpu_custom_call.1} parent=0
    #allocation3 [shape = 'u8[2048]{0}', space=vmem, size = 0x800, scoped, tag = 'input window, operand 0, single buffered']
    #allocation4 [shape = 's32[1]{0}', space=sflag, size = 0x4, scoped, tag = 'scoped memory for tpu_custom_call.1']
    #allocation5 [shape = 's32[1]{0}', space=sflag, size = 0x4, scoped, tag = 'scoped memory for tpu_custom_call.1']
    #allocation6 [shape = 'u8[32768]{0}', space=vmem, size = 0x8000, scoped, tag = 'input window, operand 1, single buffered']
    #allocation7 [shape = 's32[1]{0}', space=sflag, size = 0x4, scoped, tag = 'scoped memory for tpu_custom_call.1']
    #allocation8 [shape = 'u8[512]{0}', space=vmem, size = 0x400, scoped, tag = 'input window, operand 2, single buffered']
    #allocation9 [shape = 'u8[32768]{0}', space=vmem, size = 0x8000, scoped, tag = 'input window, operand 3, single buffered']
    #allocation10 [shape = 's32[1]{0}', space=sflag, size = 0x4, scoped, tag = 'scoped memory for tpu_custom_call.1']
    #allocation11 [shape = 'u8[512]{0}', space=vmem, size = 0x400, scoped, tag = 'input window, operand 4, single buffered']
    #allocation12 [shape = 'u8[65536]{0}', space=vmem, size = 0x10000, scoped, tag = 'input window, operand 5, single buffered']
    #allocation13 [shape = 's32[1]{0}', space=sflag, size = 0x4, scoped, tag = 'scoped memory for tpu_custom_call.1']
    #allocation14 [shape = 'u8[512]{0}', space=vmem, size = 0x400, scoped, tag = 'input window, operand 6, single buffered']
    #allocation15 [shape = 'u8[4096]{0}', space=vmem, size = 0x1000, scoped, tag = 'output window, operand 0, single buffered']
    %12 = vsyncpa [#allocation4], 0
    %13 = vsyncpa [#allocation7], 0
    %14 = vsyncpa [#allocation10], 0
    %15 = vsyncpa [#allocation13], 0
    %16 = vsyncpa [#allocation5], 0
    // Predicated region
    $region2: #{tpu_custom_call.1} parent=1 // pred_check
      _
    $region3: #{tpu_custom_call.1} parent=1 // pred_check_branch
      %18 = sbr.rel (0) target = $region5
    $region4: #{tpu_custom_call.1} parent=1 // pred_region
      %s20 = ssub.s32 64, 64
      %21 = vsyncadd [#allocation4], %s20
      %s23 = sshll.u32 [#allocation3], 4
      %s24 = int_to_ptr.vmem [resolvable:$true] %s23
      %26 = dma.hbm_to_vmem [thread:$0]  %s0, 64, %s24, [#allocation4]
    $region5: #{tpu_custom_call.1} parent=1 // pred_fallthru
      _
    // Predicated region
    $region6: #{tpu_custom_call.1} parent=1 // pred_check
      _
    $region7: #{tpu_custom_call.1} parent=1 // pred_check_branch
      %28 = sbr.rel (0) target = $region9
    $region8: #{tpu_custom_call.1} parent=1 // pred_region
      %s30 = ssub.s32 1024, 1024
      %31 = vsyncadd [#allocation7], %s30
      %s32 = sshll.u32 [#allocation6], 4
      %s33 = int_to_ptr.vmem [resolvable:$true] %s32
      %38 = dma.hbm_to_vmem [thread:$0]  %s1, 1024, %s33, [#allocation7], 64, 64, 4
    $region9: #{tpu_custom_call.1} parent=1 // pred_fallthru
      _
    // Predicated region
    $region10: #{tpu_custom_call.1} parent=1 // pred_check
      _
    $region11: #{tpu_custom_call.1} parent=1 // pred_check_branch
      %40 = sbr.rel (0) target = $region13
    $region12: #{tpu_custom_call.1} parent=1 // pred_region
      %s42 = ssub.s32 16, 16
      %43 = vsyncadd [#allocation7], %s42
      %s45 = sshll.u32 [#allocation8], 4
      %s46 = int_to_ptr.vmem [resolvable:$true] %s45
      %48 = dma.hbm_to_vmem [thread:$0]  %s2, 16, %s46, [#allocation7]
    $region13: #{tpu_custom_call.1} parent=1 // pred_fallthru
      _
    // Predicated region
    $region14: #{tpu_custom_call.1} parent=1 // pred_check
      _
    $region15: #{tpu_custom_call.1} parent=1 // pred_check_branch
      %50 = sbr.rel (0) target = $region17
    $region16: #{tpu_custom_call.1} parent=1 // pred_region
      %s52 = ssub.s32 1024, 1024
      %53 = vsyncadd [#allocation10], %s52
      %s54 = sshll.u32 [#allocation9], 4
      %s55 = int_to_ptr.vmem [resolvable:$true] %s54
      %60 = dma.hbm_to_vmem [thread:$0]  %s3, 1024, %s55, [#allocation10], 64, 64, 4
    $region17: #{tpu_custom_call.1} parent=1 // pred_fallthru
      _
    // Predicated region
    $region18: #{tpu_custom_call.1} parent=1 // pred_check
      _
    $region19: #{tpu_custom_call.1} parent=1 // pred_check_branch
      %62 = sbr.rel (0) target = $region21
    $region20: #{tpu_custom_call.1} parent=1 // pred_region
      %s64 = ssub.s32 16, 16
      %65 = vsyncadd [#allocation10], %s64
      %s67 = sshll.u32 [#allocation11], 4
      %s68 = int_to_ptr.vmem [resolvable:$true] %s67
      %70 = dma.hbm_to_vmem [thread:$0]  %s4, 16, %s68, [#allocation10]
    $region21: #{tpu_custom_call.1} parent=1 // pred_fallthru
      _
    // Predicated region
    $region22: #{tpu_custom_call.1} parent=1 // pred_check
      _
    $region23: #{tpu_custom_call.1} parent=1 // pred_check_branch
      %72 = sbr.rel (0) target = $region25
    $region24: #{tpu_custom_call.1} parent=1 // pred_region
      %s74 = ssub.s32 2048, 2048
      %75 = vsyncadd [#allocation13], %s74
      %s76 = sshll.u32 [#allocation12], 4
      %s77 = int_to_ptr.vmem [resolvable:$true] %s76
      %82 = dma.hbm_to_vmem [thread:$0]  %s5, 2048, %s77, [#allocation13], 128, 128, 8
    $region25: #{tpu_custom_call.1} parent=1 // pred_fallthru
      _
    // Predicated region
    $region26: #{tpu_custom_call.1} parent=1 // pred_check
      _
    $region27: #{tpu_custom_call.1} parent=1 // pred_check_branch
      %84 = sbr.rel (0) target = $region29
    $region28: #{tpu_custom_call.1} parent=1 // pred_region
      %s86 = ssub.s32 16, 16
      %87 = vsyncadd [#allocation13], %s86
      %s89 = sshll.u32 [#allocation14], 4
      %s90 = int_to_ptr.vmem [resolvable:$true] %s89
      %92 = dma.hbm_to_vmem [thread:$0]  %s6, 16, %s90, [#allocation13]
    $region29: #{tpu_custom_call.1} parent=1 // pred_fallthru
      _
    // Predicated region
    $region30: #{tpu_custom_call.1} parent=1 // pred_check
      _
    $region31: #{tpu_custom_call.1} parent=1 // pred_check_branch
      %94 = sbr.rel (0) target = $region33
    $region32: #{tpu_custom_call.1} parent=1 // pred_region
      %95 = dma.done [#allocation4], 64
    $region33: #{tpu_custom_call.1} parent=1 // pred_fallthru
      _
    // Predicated region
    $region34: #{tpu_custom_call.1} parent=1 // pred_check
      _
    $region35: #{tpu_custom_call.1} parent=1 // pred_check_branch
      %97 = sbr.rel (0) target = $region37
    $region36: #{tpu_custom_call.1} parent=1 // pred_region
      %98 = dma.done [#allocation7], 1024
    $region37: #{tpu_custom_call.1} parent=1 // pred_fallthru
      _
    // Predicated region
    $region38: #{tpu_custom_call.1} parent=1 // pred_check
      _
    $region39: #{tpu_custom_call.1} parent=1 // pred_check_branch
      %100 = sbr.rel (0) target = $region41
    $region40: #{tpu_custom_call.1} parent=1 // pred_region
      %101 = dma.done [#allocation7], 16
    $region41: #{tpu_custom_call.1} parent=1 // pred_fallthru
      _
    // Predicated region
    $region42: #{tpu_custom_call.1} parent=1 // pred_check
      _
    $region43: #{tpu_custom_call.1} parent=1 // pred_check_branch
      %103 = sbr.rel (0) target = $region45
    $region44: #{tpu_custom_call.1} parent=1 // pred_region
      %104 = dma.done [#allocation10], 1024
    $region45: #{tpu_custom_call.1} parent=1 // pred_fallthru
      _
    // Predicated region
    $region46: #{tpu_custom_call.1} parent=1 // pred_check
      _
    $region47: #{tpu_custom_call.1} parent=1 // pred_check_branch
      %106 = sbr.rel (0) target = $region49
    $region48: #{tpu_custom_call.1} parent=1 // pred_region
      %107 = dma.done [#allocation10], 16
    $region49: #{tpu_custom_call.1} parent=1 // pred_fallthru
      _
    // Predicated region
    $region50: #{tpu_custom_call.1} parent=1 // pred_check
      _
    $region51: #{tpu_custom_call.1} parent=1 // pred_check_branch
      %109 = sbr.rel (0) target = $region53
    $region52: #{tpu_custom_call.1} parent=1 // pred_region
      %110 = dma.done [#allocation13], 2048
    $region53: #{tpu_custom_call.1} parent=1 // pred_fallthru
      _
    // Predicated region
    $region54: #{tpu_custom_call.1} parent=1 // pred_check
      _
    $region55: #{tpu_custom_call.1} parent=1 // pred_check_branch
      %112 = sbr.rel (0) target = $region57
    $region56: #{tpu_custom_call.1} parent=1 // pred_region
      %113 = dma.done [#allocation13], 16
    $region57: #{tpu_custom_call.1} parent=1 // pred_fallthru
      _
    %p115 = scmp.eq.s32.totalorder 0, 0
    // Predicated region
    $region58: #{tpu_custom_call.1} parent=1 // pred_check
      %p116 = pneg %p115
    $region59: #{tpu_custom_call.1} parent=1 // pred_check_branch
      %118 = sbr.rel (%p116) target = $region61
    $region60: #{tpu_custom_call.1} parent=1 // pred_region
      %119 = vst [vmem:[#allocation2] sm:$0xff] 0.0
    $region61: #{tpu_custom_call.1} parent=1 // pred_fallthru
      _
    %v120 = vld [vmem:[#allocation3] sm:$0xf]
    %v121 = vld [vmem:[#allocation6] sm:$0xf]
    %v122 = vld [vmem:[#allocation6 + $0x4] sm:$0xf]
    %v123 = vld [vmem:[#allocation6 + $0x8] sm:$0xf]
    %v124 = vld [vmem:[#allocation6 + $0xc] sm:$0xf]
    %v125 = vld [vmem:[#allocation6 + $0x10] sm:$0xf]
    %v126 = vld [vmem:[#allocation6 + $0x14] sm:$0xf]
    %v127 = vld [vmem:[#allocation6 + $0x18] sm:$0xf]
    %v128 = vld [vmem:[#allocation6 + $0x1c] sm:$0xf]
    %v129 = vld [vmem:[#allocation6 + $0x20] sm:$0xf]
    %v130 = vld [vmem:[#allocation6 + $0x24] sm:$0xf]
    %v131 = vld [vmem:[#allocation6 + $0x28] sm:$0xf]
    %v132 = vld [vmem:[#allocation6 + $0x2c] sm:$0xf]
    %v133 = vld [vmem:[#allocation6 + $0x30] sm:$0xf]
    %v134 = vld [vmem:[#allocation6 + $0x34] sm:$0xf]
    %v135 = vld [vmem:[#allocation6 + $0x38] sm:$0xf]
    %v136 = vld [vmem:[#allocation6 + $0x3c] sm:$0xf]
    %v137 = vld [vmem:[#allocation8] sm:$0x1]
    %v139 = vlaneseq
    %v140 = vshrl.u32 %v139, 7
    %v141 = vsub.s32 0, %v140
    %v142 = vrot.slane %v137, %v141
    %v160 = vunpack.c.l.b16 %v121
    %v161 = vunpack.c.l.b16 %v122
    %v162 = vunpack.c.l.b16 %v123
    %v163 = vunpack.c.l.b16 %v124
    %v164 = vunpack.c.l.b16 %v125
    %v165 = vunpack.c.l.b16 %v126
    %v166 = vunpack.c.l.b16 %v127
    %v167 = vunpack.c.l.b16 %v128
    %v168 = vunpack.c.l.b16 %v129
    %v169 = vunpack.c.l.b16 %v130
    %v170 = vunpack.c.l.b16 %v131
    %v171 = vunpack.c.l.b16 %v132
    %v172 = vunpack.c.l.b16 %v133
    %v173 = vunpack.c.l.b16 %v134
    %v174 = vunpack.c.l.b16 %v135
    %v175 = vunpack.c.l.b16 %v136
    %v176 = vpack.c.b16 %v161, %v160
    %v177 = vpack.c.b16 %v163, %v162
    %v178 = vpack.c.b16 %v165, %v164
    %v179 = vpack.c.b16 %v167, %v166
    %v180 = vpack.c.b16 %v169, %v168
    %v181 = vpack.c.b16 %v171, %v170
    %v182 = vpack.c.b16 %v173, %v172
    %v183 = vpack.c.b16 %v175, %v174
    %192 = vmatprep.subr.bf16.mxu0 0
    %193 = vmatpush1.bf16.msra.mxu0 %v176
    %194 = vmatprep.subr.bf16.mxu0 0
    %195 = vmatpush1.bf16.msra.mxu0 %v177
    %196 = vmatprep.subr.bf16.mxu0 0
    %197 = vmatpush1.bf16.msra.mxu0 %v178
    %198 = vmatprep.subr.bf16.mxu0 0
    %199 = vmatpush1.bf16.msra.mxu0 %v179
    %200 = vmatprep.subr.bf16.mxu0 0
    %201 = vmatpush1.bf16.msra.mxu0 %v180
    %202 = vmatprep.subr.bf16.mxu0 0
    %203 = vmatpush1.bf16.msra.mxu0 %v181
    %204 = vmatprep.subr.bf16.mxu0 0
    %205 = vmatpush1.bf16.msra.mxu0 %v182
    %206 = vmatprep.subr.bf16.mxu0 0
    %207 = vmatpush1.bf16.msra.mxu0 %v183
    %208 = vmatprep.subr.bf16.mxu0 0
    %209 = vmatpush1.bf16.msra.mxu0 0
    %210 = vmatprep.subr.bf16.mxu0 0
    %211 = vmatpush1.bf16.msra.mxu0 0
    %212 = vmatprep.subr.bf16.mxu0 0
    %213 = vmatpush1.bf16.msra.mxu0 0
    %214 = vmatprep.subr.bf16.mxu0 0
    %215 = vmatpush1.bf16.msra.mxu0 0
    %216 = vmatprep.subr.bf16.mxu0 0
    %217 = vmatpush1.bf16.msra.mxu0 0
    %218 = vmatprep.subr.bf16.mxu0 0
    %219 = vmatpush1.bf16.msra.mxu0 0
    %220 = vmatprep.subr.bf16.mxu0 0
    %221 = vmatpush1.bf16.msra.mxu0 0
    %222 = vmatprep.subr.bf16.mxu0 0
    %223 = vmatpush1.bf16.msra.mxu0 0
    %224 = vmatprep.mubr.bf16.mxu0 0
    %225 = vmatmul.mubr.bf16.gmra.mrb[0].mxu0 %v120
    %v226 = vpop.f32.mrb[0].mxu0
    %v227 = vadd.f32 %v142, %v226
    %v228 = vpop.f32.mrb[0].mxu0
    %v229 = vpop.f32.mrb[0].mxu0
    %v230 = vpop.f32.mrb[0].mxu0
    %231 = vdwg.mxu0
    %v232 = vtanh.pop %v227
    %v233 = vld [vmem:[#allocation2] sm:$0xff]
    %v234 = vpack.c.bf16 %v232, %v232
    %v235 = vld [vmem:[#allocation9] sm:$0xf]
    %v236 = vld [vmem:[#allocation9 + $0x4] sm:$0xf]
    %v237 = vld [vmem:[#allocation9 + $0x8] sm:$0xf]
    %v238 = vld [vmem:[#allocation9 + $0xc] sm:$0xf]
    %v239 = vld [vmem:[#allocation9 + $0x10] sm:$0xf]
    %v240 = vld [vmem:[#allocation9 + $0x14] sm:$0xf]
    %v241 = vld [vmem:[#allocation9 + $0x18] sm:$0xf]
    %v242 = vld [vmem:[#allocation9 + $0x1c] sm:$0xf]
    %v243 = vld [vmem:[#allocation9 + $0x20] sm:$0xf]
    %v244 = vld [vmem:[#allocation9 + $0x24] sm:$0xf]
    %v245 = vld [vmem:[#allocation9 + $0x28] sm:$0xf]
    %v246 = vld [vmem:[#allocation9 + $0x2c] sm:$0xf]
    %v247 = vld [vmem:[#allocation9 + $0x30] sm:$0xf]
    %v248 = vld [vmem:[#allocation9 + $0x34] sm:$0xf]
    %v249 = vld [vmem:[#allocation9 + $0x38] sm:$0xf]
    %v250 = vld [vmem:[#allocation9 + $0x3c] sm:$0xf]
    %v267 = vunpack.c.l.b16 %v235
    %v268 = vunpack.c.l.b16 %v236
    %v269 = vunpack.c.l.b16 %v237
    %v270 = vunpack.c.l.b16 %v238
    %v271 = vunpack.c.l.b16 %v239
    %v272 = vunpack.c.l.b16 %v240
    %v273 = vunpack.c.l.b16 %v241
    %v274 = vunpack.c.l.b16 %v242
    %v275 = vunpack.c.l.b16 %v243
    %v276 = vunpack.c.l.b16 %v244
    %v277 = vunpack.c.l.b16 %v245
    %v278 = vunpack.c.l.b16 %v246
    %v279 = vunpack.c.l.b16 %v247
    %v280 = vunpack.c.l.b16 %v248
    %v281 = vunpack.c.l.b16 %v249
    %v282 = vunpack.c.l.b16 %v250
    %v283 = vpack.c.b16 %v268, %v267
    %v284 = vpack.c.b16 %v270, %v269
    %v285 = vpack.c.b16 %v272, %v271
    %v286 = vpack.c.b16 %v274, %v273
    %v287 = vpack.c.b16 %v276, %v275
    %v288 = vpack.c.b16 %v278, %v277
    %v289 = vpack.c.b16 %v280, %v279
    %v290 = vpack.c.b16 %v282, %v281
    %299 = vmatprep.subr.bf16.mxu0 0
    %300 = vmatpush1.bf16.msra.mxu0 %v283
    %301 = vmatprep.subr.bf16.mxu0 0
    %302 = vmatpush1.bf16.msra.mxu0 %v284
    %303 = vmatprep.subr.bf16.mxu0 0
    %304 = vmatpush1.bf16.msra.mxu0 %v285
    %305 = vmatprep.subr.bf16.mxu0 0
    %306 = vmatpush1.bf16.msra.mxu0 %v286
    %307 = vmatprep.subr.bf16.mxu0 0
    %308 = vmatpush1.bf16.msra.mxu0 %v287
    %309 = vmatprep.subr.bf16.mxu0 0
    %310 = vmatpush1.bf16.msra.mxu0 %v288
    %311 = vmatprep.subr.bf16.mxu0 0
    %312 = vmatpush1.bf16.msra.mxu0 %v289
    %313 = vmatprep.subr.bf16.mxu0 0
    %314 = vmatpush1.bf16.msra.mxu0 %v290
    %315 = vmatprep.subr.bf16.mxu0 0
    %316 = vmatpush1.bf16.msra.mxu0 0
    %317 = vmatprep.subr.bf16.mxu0 0
    %318 = vmatpush1.bf16.msra.mxu0 0
    %319 = vmatprep.subr.bf16.mxu0 0
    %320 = vmatpush1.bf16.msra.mxu0 0
    %321 = vmatprep.subr.bf16.mxu0 0
    %322 = vmatpush1.bf16.msra.mxu0 0
    %323 = vmatprep.subr.bf16.mxu0 0
    %324 = vmatpush1.bf16.msra.mxu0 0
    %325 = vmatprep.subr.bf16.mxu0 0
    %326 = vmatpush1.bf16.msra.mxu0 0
    %327 = vmatprep.subr.bf16.mxu0 0
    %328 = vmatpush1.bf16.msra.mxu0 0
    %329 = vmatprep.subr.bf16.mxu0 0
    %330 = vmatpush1.bf16.msra.mxu0 0
    %331 = vmatprep.mubr.bf16.mxu0 0
    %332 = vmatmul.mubr.bf16.gmra.mrb[0].mxu0 %v234
    %v333 = vpop.f32.mrb[0].mxu0
    %v334 = vadd.f32 0.0, %v333
    %v335 = vpop.f32.mrb[0].mxu0
    %v336 = vpop.f32.mrb[0].mxu0
    %v337 = vpop.f32.mrb[0].mxu0
    %338 = vdwg.mxu0
    %v339 = vadd.f32 %v233, %v334
    %340 = vst [vmem:[#allocation2] sm:$0xff] %v339
    // Predicated region
    $region62: #{tpu_custom_call.1} parent=1 // pred_check
      %p341 = pneg %p115
    $region63: #{tpu_custom_call.1} parent=1 // pred_check_branch
      %343 = sbr.rel (%p341) target = $region65
    $region64: #{tpu_custom_call.1} parent=1 // pred_region
      %v344 = vld [vmem:[#allocation2] sm:$0xff]
      %v345 = vld [vmem:[#allocation11] sm:$0x1]
      %v347 = vlaneseq
      %v348 = vshrl.u32 %v347, 7
      %v349 = vsub.s32 0, %v348
      %v350 = vrot.slane %v345, %v349
      %v352 = vadd.f32 %v344, %v350
      %v353 = vld [vmem:[#allocation12] sm:$0xff]
      %v354 = vld [vmem:[#allocation12 + $0x8] sm:$0xff]
      %v355 = vld [vmem:[#allocation12 + $0x10] sm:$0xff]
      %v356 = vld [vmem:[#allocation12 + $0x18] sm:$0xff]
      %v357 = vld [vmem:[#allocation12 + $0x20] sm:$0xff]
      %v358 = vld [vmem:[#allocation12 + $0x28] sm:$0xff]
      %v359 = vld [vmem:[#allocation12 + $0x30] sm:$0xff]
      %v360 = vld [vmem:[#allocation12 + $0x38] sm:$0xff]
      %v361 = vld [vmem:[#allocation12 + $0x40] sm:$0xff]
      %v362 = vld [vmem:[#allocation12 + $0x48] sm:$0xff]
      %v363 = vld [vmem:[#allocation12 + $0x50] sm:$0xff]
      %v364 = vld [vmem:[#allocation12 + $0x58] sm:$0xff]
      %v365 = vld [vmem:[#allocation12 + $0x60] sm:$0xff]
      %v366 = vld [vmem:[#allocation12 + $0x68] sm:$0xff]
      %v367 = vld [vmem:[#allocation12 + $0x70] sm:$0xff]
      %v368 = vld [vmem:[#allocation12 + $0x78] sm:$0xff]
      %v369 = vld [vmem:[#allocation14] sm:$0x1]
      %v371 = vlaneseq
      %v372 = vshrl.u32 %v371, 7
      %v373 = vsub.s32 0, %v372
      %v374 = vrot.slane %v369, %v373
      %376 = vmatprep.subr.mxu0 0.0
      %377 = vmatpush1.msra.mxu0 %v353
      %378 = vmatprep.subr.mxu0 0.0
      %379 = vmatpush1.msra.mxu0 %v354
      %380 = vmatprep.subr.mxu0 0.0
      %381 = vmatpush1.msra.mxu0 %v355
      %382 = vmatprep.subr.mxu0 0.0
      %383 = vmatpush1.msra.mxu0 %v356
      %384 = vmatprep.subr.mxu0 0.0
      %385 = vmatpush1.msra.mxu0 %v357
      %386 = vmatprep.subr.mxu0 0.0
      %387 = vmatpush1.msra.mxu0 %v358
      %388 = vmatprep.subr.mxu0 0.0
      %389 = vmatpush1.msra.mxu0 %v359
      %390 = vmatprep.subr.mxu0 0.0
      %391 = vmatpush1.msra.mxu0 %v360
      %392 = vmatprep.subr.mxu0 0.0
      %393 = vmatpush1.msra.mxu0 %v361
      %394 = vmatprep.subr.mxu0 0.0
      %395 = vmatpush1.msra.mxu0 %v362
      %396 = vmatprep.subr.mxu0 0.0
      %397 = vmatpush1.msra.mxu0 %v363
      %398 = vmatprep.subr.mxu0 0.0
      %399 = vmatpush1.msra.mxu0 %v364
      %400 = vmatprep.subr.mxu0 0.0
      %401 = vmatpush1.msra.mxu0 %v365
      %402 = vmatprep.subr.mxu0 0.0
      %403 = vmatpush1.msra.mxu0 %v366
      %404 = vmatprep.subr.mxu0 0.0
      %405 = vmatpush1.msra.mxu0 %v367
      %406 = vmatprep.subr.mxu0 0.0
      %407 = vmatpush1.msra.mxu0 %v368
      %408 = vmatprep.subr.mxu0 0.0
      %409 = vmatpush1.msra.mxu0 0.0
      %410 = vmatprep.subr.mxu0 0.0
      %411 = vmatpush1.msra.mxu0 0.0
      %412 = vmatprep.subr.mxu0 0.0
      %413 = vmatpush1.msra.mxu0 0.0
      %414 = vmatprep.subr.mxu0 0.0
      %415 = vmatpush1.msra.mxu0 0.0
      %416 = vmatprep.subr.mxu0 0.0
      %417 = vmatpush1.msra.mxu0 0.0
      %418 = vmatprep.subr.mxu0 0.0
      %419 = vmatpush1.msra.mxu0 0.0
      %420 = vmatprep.subr.mxu0 0.0
      %421 = vmatpush1.msra.mxu0 0.0
      %422 = vmatprep.subr.mxu0 0.0
      %423 = vmatpush1.msra.mxu0 0.0
      %424 = vmatprep.subr.mxu0 0.0
      %425 = vmatpush1.msra.mxu0 0.0
      %426 = vmatprep.subr.mxu0 0.0
      %427 = vmatpush1.msra.mxu0 0.0
      %428 = vmatprep.subr.mxu0 0.0
      %429 = vmatpush1.msra.mxu0 0.0
      %430 = vmatprep.subr.mxu0 0.0
      %431 = vmatpush1.msra.mxu0 0.0
      %432 = vmatprep.subr.mxu0 0.0
      %433 = vmatpush1.msra.mxu0 0.0
      %434 = vmatprep.subr.mxu0 0.0
      %435 = vmatpush1.msra.mxu0 0.0
      %436 = vmatprep.subr.mxu0 0.0
      %437 = vmatpush1.msra.mxu0 0.0
      %438 = vmatprep.subr.mxu0 0.0
      %439 = vmatpush1.msra.mxu0 0.0
      %440 = vmatprep.mubr.f32.mxu0 0.0
      %441 = vmatmul.mubr.f32.gmra.mrb[0].mxu0 %v352
      %v442 = vpop.f32.mrb[0].mxu0
      %v443 = vadd.f32 %v374, %v442
      %v444 = vpop.f32.mrb[0].mxu0
      %445 = vdwg.mxu0
      %446 = vst [vmem:[#allocation15] sm:$0xff] %v443
    $region65: #{tpu_custom_call.1} parent=1 // pred_fallthru
      _
    // Predicated region
    $region66: #{tpu_custom_call.1} parent=1 // pred_check
      _
    $region67: #{tpu_custom_call.1} parent=1 // pred_check_branch
      %448 = sbr.rel (0) target = $region69
    $region68: #{tpu_custom_call.1} parent=1 // pred_region
      %s450 = ssub.s32 128, 128
      %451 = vsyncadd [#allocation5], %s450
      %s453 = sshll.u32 [#allocation15], 4
      %s454 = int_to_ptr.vmem [resolvable:$true] %s453
      %456 = dma.vmem_to_hbm [thread:$0]  %s454, 128, %s7, [#allocation5]
    $region69: #{tpu_custom_call.1} parent=1 // pred_fallthru
      _
    // Predicated region
    $region70: #{tpu_custom_call.1} parent=1 // pred_check
      _
    $region71: #{tpu_custom_call.1} parent=1 // pred_check_branch
      %458 = sbr.rel (0) target = $region73
    $region72: #{tpu_custom_call.1} parent=1 // pred_region
      %459 = dma.done [#allocation5], 128
    $region73: #{tpu_custom_call.1} parent=1 // pred_fallthru
      _
    %460 = vsyncpa [#allocation4], 1
    %461 = vsyncpa [#allocation7], 1
    %462 = vsyncpa [#allocation10], 1
    %463 = vsyncpa [#allocation13], 1
    %464 = vsyncpa [#allocation5], 1

</llo_original>
